<compile_context>
chip_gen: v5e
topology: v5e:2x2
jax: 0.10.0
libtpu: 0.0.40
codegen_flags: <defaults>
</compile_context>

<pallas_src>
import jax
import jax.numpy as jnp
from jax.experimental import pallas as pl
from jax.experimental.pallas import tpu as pltpu


def edge_attention_forward(edge_features, weight, bias, *,
                           tile=2048, negative_slope=0.01):
    """EdgeAttention forward.

    edge_features: (E, D) float32
    weight:        (H, D) float32   (PyTorch nn.Linear layout)
    bias:          (H,)   float32
    returns:       (E,)   float32 attention coefficients (softmax over edges)
    """
    e, d = edge_features.shape
    h = weight.shape[0]

    # Tile over edges (sublane dim of the input block must be a multiple of 8
    # or equal to E). Small graphs get one exact block; big graphs get
    # lane-aligned 128*k tiles.
    if e <= tile:
        tile_e = ((e + 7) // 8) * 8
    else:
        tile_e = max(128, (int(tile) // 128) * 128)
    num_tiles = pl.cdiv(e, tile_e)
    e_cov = num_tiles * tile_e
    needs_mask = (e_cov != e)        # only the tail tile can contain padding
    neg_big = -1e30                  # finite "minus infinity" for masked slots

    x = edge_features.astype(jnp.float32)            # (E, D) -- no copy/transpose
    w = weight.astype(jnp.float32)                   # (H, D)
    b = bias.astype(jnp.float32).reshape(h, 1)       # (H, 1)

    def kernel(x_ref, w_ref, b_ref, o_ref, s_buf, m_sc, l_sc):
        i = pl.program_id(0)

        @pl.when(i == 0)
        def _init():
            m_sc[...] = jnp.full((1, 1), neg_big, jnp.float32)
            l_sc[...] = jnp.zeros((1, 1), jnp.float32)

        # Linear layer, contracting D with D:  (H, D) . (tile_e, D) -> (H, tile_e)
        # Keeps the per-edge axis on lanes so scores come out lane-dense.
        t = jax.lax.dot_general(
            w_ref[...], x_ref[...],
            dimension_numbers=(((1,), (1,)), ((), ())),
            preferred_element_type=jnp.float32) + b_ref[...]

        # Squared-sum over hidden dim -> (1, tile_e) per-edge scores.
        s = jnp.sum(t * t, axis=0, keepdims=True)
        # LeakyReLU (identity for the always-nonnegative squared sums; kept
        # for fidelity with the PyTorch module).
        s = jnp.where(s >= 0.0, s, negative_slope * s)

        if needs_mask:
            # Only semantically needed on the tail tile; a compare+select per
            # vreg is negligible next to the matmul, so apply unconditionally.
            col = i * tile_e + jax.lax.broadcasted_iota(jnp.int32, s.shape, 1)
            s = jnp.where(col < e, s, neg_big)

        # Stash raw scores in the resident VMEM scratch (fused softmax pass 2).
        s_buf[pl.ds(i, 1), :] = s

        # Online softmax statistics (running max / rescaled sum-exp).
        m_old = m_sc[...]
        m_new = jnp.maximum(m_old, jnp.max(s, axis=1, keepdims=True))
        l_sc[...] = (l_sc[...] * jnp.exp(m_old - m_new)
                     + jnp.sum(jnp.exp(s - m_new), axis=1, keepdims=True))
        m_sc[...] = m_new

        @pl.when(i == pl.num_programs(0) - 1)
        def _finalize():
            # softmax = exp(s - (m + log l)) : one exp per element, no divide.
            c = m_sc[...] + jnp.log(l_sc[...])
            o_ref[...] = jnp.exp(s_buf[...] - c)

    # VMEM budget: resident output block + score scratch + pipelined input tiles.
    vmem_need = (2 * e_cov * 4                 # output block + score scratch
                 + 4 * tile_e * d * 4          # double-buffered edge tiles (margin)
                 + 4 * (h * d + h) * 4
                 + (2 << 20))
    vmem_limit = int(min(max(vmem_need, 32 << 20), 64 << 20))

    out = pl.pallas_call(
        kernel,
        out_shape=jax.ShapeDtypeStruct((num_tiles, tile_e), jnp.float32),
        grid=(num_tiles,),
        in_specs=[pl.BlockSpec((tile_e, d), lambda i: (i, 0)),   # edge row tile
                  pl.BlockSpec((h, d), lambda i: (0, 0)),        # resident weight
                  pl.BlockSpec((h, 1), lambda i: (0, 0))],       # resident bias
        out_specs=pl.BlockSpec((num_tiles, tile_e), lambda i: (0, 0)),  # resident
        scratch_shapes=[pltpu.VMEM((num_tiles, tile_e), jnp.float32),   # raw scores
                        pltpu.VMEM((1, 1), jnp.float32),                # running max
                        pltpu.VMEM((1, 1), jnp.float32)],               # running sum-exp
        compiler_params=pltpu.CompilerParams(
            dimension_semantics=("arbitrary",),   # sequential: online-softmax stats
            vmem_limit_bytes=vmem_limit),
    )(x, w, b)

    # Row-major flatten maps edge j of tile i to flat index i*tile_e + j.
    return out.reshape(-1)[:e]


if __name__ == "__main__":
    key = jax.random.PRNGKey(0)
    k_x, k_w, k_b = jax.random.split(key, 3)

    num_edges = 200          # not a multiple of 128
    edge_feature_dim = 16
    hidden_dim = 32

    edge_features = jax.random.normal(
        k_x, (num_edges, edge_feature_dim), jnp.float32)
    # nn.Linear default init: U(-1/sqrt(fan_in), 1/sqrt(fan_in))
    lim = 1.0 / (edge_feature_dim ** 0.5)
    weight = jax.random.uniform(
        k_w, (hidden_dim, edge_feature_dim), jnp.float32, -lim, lim)
    bias = jax.random.uniform(k_b, (hidden_dim,), jnp.float32, -lim, lim)

    coeffs = edge_attention_forward(edge_features, weight, bias)
    coeffs = jax.block_until_ready(coeffs)

    # Pure-JAX reference for correctness.
    t_ref = edge_features @ weight.T + bias
    s_ref = jnp.sum(t_ref * t_ref, axis=1)
    s_ref = jnp.where(s_ref >= 0.0, s_ref, 0.01 * s_ref)
    ref = jax.nn.softmax(s_ref, axis=0)

    assert coeffs.shape == (num_edges,)
    assert abs(float(coeffs.sum()) - 1.0) < 1e-3
    assert jnp.allclose(coeffs, ref, atol=1e-5, rtol=1e-3)
    print("KERNEL_OK")
</pallas_src>

<mosaic_0001>
module attributes {stable_mosaic.version = 11 : i64} {
  func.func @kernel(%arg0: i32, %arg1: memref<200x16xf32, #tpu.memory_space<vmem>>, %arg2: memref<32x16xf32, #tpu.memory_space<vmem>>, %arg3: memref<32x1xf32, #tpu.memory_space<vmem>>, %arg4: memref<1x200xf32, #tpu.memory_space<vmem>>, %arg5: memref<1x200xf32, #tpu.memory_space<vmem>>, %arg6: memref<1x1xf32, #tpu.memory_space<vmem>>, %arg7: memref<1x1xf32, #tpu.memory_space<vmem>>) attributes {dimension_semantics = [#tpu.dimension_semantics<arbitrary>], iteration_bounds = array<i64: 1>, scalar_prefetch = 0 : i64, scratch_operands = 3 : i64, tpu.core_type = #tpu.core_type<tc>, window_params = [{transform_indices = @transform_0, window_bounds = array<i64: 200, 16>}, {pipeline_mode = #tpu.pipeline_mode<synchronous>, transform_indices = @transform_1, window_bounds = array<i64: 32, 16>}, {pipeline_mode = #tpu.pipeline_mode<synchronous>, transform_indices = @transform_2, window_bounds = array<i64: 32, 1>}, {pipeline_mode = #tpu.pipeline_mode<synchronous>, transform_indices = @transform_3, window_bounds = array<i64: 1, 200>}]} {
    %c0_i32 = arith.constant 0 : i32
    %0 = arith.cmpi eq, %arg0, %c0_i32 : i32
    %1 = arith.extui %0 : i1 to i32
    %c0_i32_0 = arith.constant 0 : i32
    %2 = arith.cmpi ne, %1, %c0_i32_0 : i32
    scf.if %2 {
      %cst_22 = arith.constant -1.000000e+30 : f32
      %38 = vector.broadcast %cst_22 : f32 to vector<1x1xf32>
      %c0_23 = arith.constant 0 : index
      %c0_24 = arith.constant 0 : index
      %39 = vector.load %arg6[%c0_23, %c0_24] : memref<1x1xf32, #tpu.memory_space<vmem>>, vector<1x1xf32>
      tpu.vector_store %arg6[%c0_23, %c0_24], %38 {strides = array<i32>} : memref<1x1xf32, #tpu.memory_space<vmem>>, vector<1x1xf32>,
      %cst_25 = arith.constant 0.000000e+00 : f32
      %40 = vector.broadcast %cst_25 : f32 to vector<1x1xf32>
      %c0_26 = arith.constant 0 : index
      %c0_27 = arith.constant 0 : index
      %41 = vector.load %arg7[%c0_26, %c0_27] : memref<1x1xf32, #tpu.memory_space<vmem>>, vector<1x1xf32>
      tpu.vector_store %arg7[%c0_26, %c0_27], %40 {strides = array<i32>} : memref<1x1xf32, #tpu.memory_space<vmem>>, vector<1x1xf32>,
    } else {
    }
    %c0 = arith.constant 0 : index
    %c0_1 = arith.constant 0 : index
    %3 = vector.load %arg2[%c0, %c0_1] : memref<32x16xf32, #tpu.memory_space<vmem>>, vector<32x16xf32>
    %c0_2 = arith.constant 0 : index
    %c0_3 = arith.constant 0 : index
    %4 = vector.load %arg1[%c0_2, %c0_3] : memref<200x16xf32, #tpu.memory_space<vmem>>, vector<200x16xf32>
    %cst = arith.constant dense<0.000000e+00> : vector<32x200xf32>
    %5 = tpu.matmul %3, %4, %cst {dimension_numbers = #tpu.dot_dimension_numbers<[1], [1], [0], [0], [0, 0, 1, 0], [], []>} : vector<32x16xf32>, vector<200x16xf32>, vector<32x200xf32> -> vector<32x200xf32>
    %c0_4 = arith.constant 0 : index
    %c0_5 = arith.constant 0 : index
    %6 = vector.load %arg3[%c0_4, %c0_5] : memref<32x1xf32, #tpu.memory_space<vmem>>, vector<32x1xf32>
    %7 = vector.broadcast %6 : vector<32x1xf32> to vector<32x200xf32>
    %8 = arith.addf %5, %7 : vector<32x200xf32>
    %9 = arith.mulf %8, %8 : vector<32x200xf32>
    %cst_6 = arith.constant dense<0.000000e+00> : vector<200xf32>
    %10 = vector.multi_reduction <add>, %9, %cst_6 [0] : vector<32x200xf32> to vector<200xf32>
    %11 = vector.shape_cast %10 : vector<200xf32> to vector<1x200xf32>
    %cst_7 = arith.constant 0.000000e+00 : f32
    %12 = vector.broadcast %cst_7 : f32 to vector<1x200xf32>
    %13 = arith.cmpf oge, %11, %12 : vector<1x200xf32>
    %cst_8 = arith.constant 0.00999999977 : f32
    %14 = vector.broadcast %cst_8 : f32 to vector<1x200xf32>
    %15 = arith.mulf %14, %11 : vector<1x200xf32>
    %16 = arith.select %13, %11, %15 : vector<1x200xi1>, vector<1x200xf32>
    %17 = arith.index_cast %arg0 : i32 to index
    %c0_9 = arith.constant 0 : index
    %18 = vector.load %arg5[%17, %c0_9] : memref<1x200xf32, #tpu.memory_space<vmem>>, vector<1x200xf32>
    tpu.vector_store %arg5[%17, %c0_9], %16 {strides = array<i32>} : memref<1x200xf32, #tpu.memory_space<vmem>>, vector<1x200xf32>,
    %c0_10 = arith.constant 0 : index
    %c0_11 = arith.constant 0 : index
    %19 = vector.load %arg6[%c0_10, %c0_11] : memref<1x1xf32, #tpu.memory_space<vmem>>, vector<1x1xf32>
    %cst_12 = arith.constant dense<0xFF800000> : vector<1xf32>
    %20 = vector.multi_reduction <maximumf>, %16, %cst_12 [1] : vector<1x200xf32> to vector<1xf32>
    %21 = vector.shape_cast %20 : vector<1xf32> to vector<1x1xf32>
    %22 = arith.maximumf %19, %21 : vector<1x1xf32>
    %c0_13 = arith.constant 0 : index
    %c0_14 = arith.constant 0 : index
    %23 = vector.load %arg7[%c0_13, %c0_14] : memref<1x1xf32, #tpu.memory_space<vmem>>, vector<1x1xf32>
    %24 = arith.subf %19, %22 : vector<1x1xf32>
    %25 = math.exp %24 : vector<1x1xf32>
    %26 = arith.mulf %23, %25 : vector<1x1xf32>
    %27 = vector.broadcast %22 : vector<1x1xf32> to vector<1x200xf32>
    %28 = arith.subf %16, %27 : vector<1x200xf32>
    %29 = math.exp %28 : vector<1x200xf32>
    %cst_15 = arith.constant dense<0.000000e+00> : vector<1xf32>
    %30 = vector.multi_reduction <add>, %29, %cst_15 [1] : vector<1x200xf32> to vector<1xf32>
    %31 = vector.shape_cast %30 : vector<1xf32> to vector<1x1xf32>
    %32 = arith.addf %26, %31 : vector<1x1xf32>
    %c0_16 = arith.constant 0 : index
    %c0_17 = arith.constant 0 : index
    %33 = vector.load %arg7[%c0_16, %c0_17] : memref<1x1xf32, #tpu.memory_space<vmem>>, vector<1x1xf32>
    tpu.vector_store %arg7[%c0_16, %c0_17], %32 {strides = array<i32>} : memref<1x1xf32, #tpu.memory_space<vmem>>, vector<1x1xf32>,
    %c0_18 = arith.constant 0 : index
    %c0_19 = arith.constant 0 : index
    %34 = vector.load %arg6[%c0_18, %c0_19] : memref<1x1xf32, #tpu.memory_space<vmem>>, vector<1x1xf32>
    tpu.vector_store %arg6[%c0_18, %c0_19], %22 {strides = array<i32>} : memref<1x1xf32, #tpu.memory_space<vmem>>, vector<1x1xf32>,
    %c0_i32_20 = arith.constant 0 : i32
    %35 = arith.cmpi eq, %arg0, %c0_i32_20 : i32
    %36 = arith.extui %35 : i1 to i32
    %c0_i32_21 = arith.constant 0 : i32
    %37 = arith.cmpi ne, %36, %c0_i32_21 : i32
    scf.if %37 {
      %c0_22 = arith.constant 0 : index
      %c0_23 = arith.constant 0 : index
      %38 = vector.load %arg6[%c0_22, %c0_23] : memref<1x1xf32, #tpu.memory_space<vmem>>, vector<1x1xf32>
      %c0_24 = arith.constant 0 : index
      %c0_25 = arith.constant 0 : index
      %39 = vector.load %arg7[%c0_24, %c0_25] : memref<1x1xf32, #tpu.memory_space<vmem>>, vector<1x1xf32>
      %40 = math.log %39 : vector<1x1xf32>
      %41 = arith.addf %38, %40 : vector<1x1xf32>
      %c0_26 = arith.constant 0 : index
      %c0_27 = arith.constant 0 : index
      %42 = vector.load %arg5[%c0_26, %c0_27] : memref<1x200xf32, #tpu.memory_space<vmem>>, vector<1x200xf32>
      %43 = vector.broadcast %41 : vector<1x1xf32> to vector<1x200xf32>
      %44 = arith.subf %42, %43 : vector<1x200xf32>
      %45 = math.exp %44 : vector<1x200xf32>
      %c0_28 = arith.constant 0 : index
      %c0_29 = arith.constant 0 : index
      %46 = vector.load %arg4[%c0_28, %c0_29] : memref<1x200xf32, #tpu.memory_space<vmem>>, vector<1x200xf32>
      tpu.vector_store %arg4[%c0_28, %c0_29], %45 {strides = array<i32>} : memref<1x200xf32, #tpu.memory_space<vmem>>, vector<1x200xf32>,
    } else {
    }
    return
  }
  func.func @transform_0(%arg0: i32) -> (i32, i32) {
    %c0_i32 = arith.constant 0 : i32
    %c0_i32_0 = arith.constant 0 : i32
    return %arg0, %c0_i32 : i32, i32
  }
  func.func @transform_1(%arg0: i32) -> (i32, i32) {
    %c0_i32 = arith.constant 0 : i32
    %c0_i32_0 = arith.constant 0 : i32
    %c0_i32_1 = arith.constant 0 : i32
    return %c0_i32, %c0_i32_0 : i32, i32
  }
  func.func @transform_2(%arg0: i32) -> (i32, i32) {
    %c0_i32 = arith.constant 0 : i32
    %c0_i32_0 = arith.constant 0 : i32
    %c0_i32_1 = arith.constant 0 : i32
    return %c0_i32, %c0_i32_0 : i32, i32
  }
  func.func @transform_3(%arg0: i32) -> (i32, i32) {
    %c0_i32 = arith.constant 0 : i32
    %c0_i32_0 = arith.constant 0 : i32
    %c0_i32_1 = arith.constant 0 : i32
    return %c0_i32, %c0_i32_0 : i32, i32
  }
}

</mosaic_0001>

<llo_original>
// kernel: tpu_custom_call.1
$region0: #{tpu_custom_call.1}
  #allocation0 [shape = 'u32[]', space=smem, size = 0x4, offset = 0x4, fixed_abs, tag = 'smem constant byte address 0x4 - core index']
  #allocation1 [shape = 'u32[72,128]{1,0:T(1,128)}', space=vmem, size = 0x9000, scoped, tag = 'internal scratch']
  #allocation2 [shape = 'f32[1,200]{1,0:T(1,128)}', space=vmem, size = 0x400, scoped, tag = 'scratch operand']
  #allocation3 [shape = 'f32[1,1]{1,0:T(1,128)}', space=vmem, size = 0x200, scoped, tag = 'scratch operand']
  #allocation4 [shape = 'f32[1,1]{1,0:T(1,128)}', space=vmem, size = 0x200, scoped, tag = 'scratch operand']
  %s0 = inlined_call_operand.vmem [shape: f32[200,16], index: 0, kind: input, shape index: {}]
  %s1 = inlined_call_operand.vmem [shape: f32[32,16], index: 1, kind: input, shape index: {}]
  %s2 = inlined_call_operand.vmem [shape: f32[32,1], index: 2, kind: input, shape index: {}]
  %s3 = inlined_call_operand.hbm [shape: f32[1,200], index: 3, kind: output, shape index: {}]
  %s4 = sld [smem:[#allocation0]]
  $region30: #{tpu_custom_call.1} parent=0
    _
  %s6 = ssub.s32 1, %s4
  %s7 = scalar_select 0, %s6, %s4
  $region1: #{tpu_custom_call.1} parent=0
    #allocation5 [shape = 'u8[1024]{0}', space=vmem, size = 0x400, scoped, tag = 'output window, operand 0, single buffered']
    #allocation6 [shape = 's32[1]{0}', space=sflag, size = 0x4, scoped, tag = 'scoped memory for tpu_custom_call.1']
    %8 = vsyncpa [#allocation6], 0
    // Predicated region
    $region2: #{tpu_custom_call.1} parent=1 // pred_check
      _
    $region3: #{tpu_custom_call.1} parent=1 // pred_check_branch
      %10 = sbr.rel (0) target = $region5
    $region4: #{tpu_custom_call.1} parent=1 // pred_region
      _
    $region5: #{tpu_custom_call.1} parent=1 // pred_fallthru
      _
    // Predicated region
    $region6: #{tpu_custom_call.1} parent=1 // pred_check
      _
    $region7: #{tpu_custom_call.1} parent=1 // pred_check_branch
      %12 = sbr.rel (0) target = $region9
    $region8: #{tpu_custom_call.1} parent=1 // pred_region
      _
    $region9: #{tpu_custom_call.1} parent=1 // pred_fallthru
      _
    // Predicated region
    $region10: #{tpu_custom_call.1} parent=1 // pred_check
      _
    $region11: #{tpu_custom_call.1} parent=1 // pred_check_branch
      %14 = sbr.rel (0) target = $region13
    $region12: #{tpu_custom_call.1} parent=1 // pred_region
      _
    $region13: #{tpu_custom_call.1} parent=1 // pred_fallthru
      _
    %p15 = scmp.eq.s32.totalorder 0, 0
    // Predicated region
    $region14: #{tpu_custom_call.1} parent=1 // pred_check
      %p16 = pneg %p15
    $region15: #{tpu_custom_call.1} parent=1 // pred_check_branch
      %18 = sbr.rel (%p16) target = $region17
    $region16: #{tpu_custom_call.1} parent=1 // pred_region
      %vm19 = vcmask 0
      %20 = vst.msk [vmem:[#allocation3] sm:$0x1] %vm19, -1e+30
      %21 = vst.msk [vmem:[#allocation4] sm:$0x1] %vm19, 0.0
    $region17: #{tpu_custom_call.1} parent=1 // pred_fallthru
      _
    %v22 = vld [vmem:[%s1] sm:$0xff]
    %v23 = vld [vmem:[%s1 + $0x8] sm:$0xff]
    %v24 = vld [vmem:[%s1 + $0x10] sm:$0xff]
    %v25 = vld [vmem:[%s1 + $0x18] sm:$0xff]
    %v26 = vld [vmem:[%s0] sm:$0xff]
    %v27 = vld [vmem:[%s0 + $0x8] sm:$0xff]
    %v28 = vld [vmem:[%s0 + $0x10] sm:$0xff]
    %v29 = vld [vmem:[%s0 + $0x18] sm:$0xff]
    %v30 = vld [vmem:[%s0 + $0x20] sm:$0xff]
    %v31 = vld [vmem:[%s0 + $0x28] sm:$0xff]
    %v32 = vld [vmem:[%s0 + $0x30] sm:$0xff]
    %v33 = vld [vmem:[%s0 + $0x38] sm:$0xff]
    %v34 = vld [vmem:[%s0 + $0x40] sm:$0xff]
    %v35 = vld [vmem:[%s0 + $0x48] sm:$0xff]
    %v36 = vld [vmem:[%s0 + $0x50] sm:$0xff]
    %v37 = vld [vmem:[%s0 + $0x58] sm:$0xff]
    %v38 = vld [vmem:[%s0 + $0x60] sm:$0xff]
    %v39 = vld [vmem:[%s0 + $0x68] sm:$0xff]
    %v40 = vld [vmem:[%s0 + $0x70] sm:$0xff]
    %v41 = vld [vmem:[%s0 + $0x78] sm:$0xff]
    %v42 = vld [vmem:[%s0 + $0x80] sm:$0xff]
    %v43 = vld [vmem:[%s0 + $0x88] sm:$0xff]
    %v44 = vld [vmem:[%s0 + $0x90] sm:$0xff]
    %v45 = vld [vmem:[%s0 + $0x98] sm:$0xff]
    %v46 = vld [vmem:[%s0 + $0xa0] sm:$0xff]
    %v47 = vld [vmem:[%s0 + $0xa8] sm:$0xff]
    %v48 = vld [vmem:[%s0 + $0xb0] sm:$0xff]
    %v49 = vld [vmem:[%s0 + $0xb8] sm:$0xff]
    %v50 = vld [vmem:[%s0 + $0xc0] sm:$0xff]
    %v51 = vld [vmem:[%s2] sm:$0xff]
    %v52 = vld [vmem:[%s2 + $0x8] sm:$0xff]
    %v53 = vld [vmem:[%s2 + $0x10] sm:$0xff]
    %v54 = vld [vmem:[%s2 + $0x18] sm:$0xff]
    %56 = vset.pattern.permute.xlu0 0
    %57 = vperm.xlu0 %56, %v51
    %v58 = vpop.permute.xlu0 %57
    %61 = vset.pattern.permute.xlu0 0
    %62 = vperm.xlu0 %61, %v52
    %v63 = vpop.permute.xlu0 %62
    %66 = vset.pattern.permute.xlu0 0
    %67 = vperm.xlu0 %66, %v53
    %v68 = vpop.permute.xlu0 %67
    %71 = vset.pattern.permute.xlu0 0
    %72 = vperm.xlu0 %71, %v54
    %v73 = vpop.permute.xlu0 %72
    %vm75 = vcmask 130048
    %v77 = vsel %vm75, %v22, 0
    %v80 = vsel %vm75, %v23, 0
    %v83 = vsel %vm75, %v24, 0
    %v86 = vsel %vm75, %v25, 0
    %v89 = vsel %vm75, %v26, 0
    %v92 = vsel %vm75, %v27, 0
    %v95 = vsel %vm75, %v28, 0
    %v98 = vsel %vm75, %v29, 0
    %v101 = vsel %vm75, %v30, 0
    %v104 = vsel %vm75, %v31, 0
    %v107 = vsel %vm75, %v32, 0
    %v110 = vsel %vm75, %v33, 0
    %v113 = vsel %vm75, %v34, 0
    %v116 = vsel %vm75, %v35, 0
    %v119 = vsel %vm75, %v36, 0
    %v122 = vsel %vm75, %v37, 0
    %v125 = vsel %vm75, %v38, 0
    %v128 = vsel %vm75, %v39, 0
    %v131 = vsel %vm75, %v40, 0
    %v134 = vsel %vm75, %v41, 0
    %v137 = vsel %vm75, %v42, 0
    %v140 = vsel %vm75, %v43, 0
    %v143 = vsel %vm75, %v44, 0
    %v146 = vsel %vm75, %v45, 0
    %v149 = vsel %vm75, %v46, 0
    %v152 = vsel %vm75, %v47, 0
    %v155 = vsel %vm75, %v48, 0
    %v158 = vsel %vm75, %v49, 0
    %v161 = vsel %vm75, %v50, 0
    %163 = vmatpush.xpose.msra.mxu0 %v134
    %164 = vmatpush.xpose.msra.mxu0 %v131
    %165 = vmatpush.xpose.msra.mxu0 %v128
    %166 = vmatpush.xpose.msra.mxu0 %v125
    %167 = vmatpush.xpose.msra.mxu0 %v122
    %168 = vmatpush.xpose.msra.mxu0 %v119
    %169 = vmatpush.xpose.msra.mxu0 %v116
    %170 = vmatpush.xpose.msra.mxu0 %v113
    %171 = vmatpush.xpose.msra.mxu0 %v110
    %172 = vmatpush.xpose.msra.mxu0 %v107
    %173 = vmatpush.xpose.msra.mxu0 %v104
    %174 = vmatpush.xpose.msra.mxu0 %v101
    %175 = vmatpush.xpose.msra.mxu0 %v98
    %176 = vmatpush.xpose.msra.mxu0 %v95
    %177 = vmatpush.xpose.msra.mxu0 %v92
    %178 = vmatpush.xpose.msra.mxu0 %v89
    %179 = vmatmul.f32.gmra.mxu0 %v77
    %v180 = vpop.f32.mrf.mxu0
    %v181 = vadd.f32 %v58, %v180
    %182 = vmatmul.f32.gmra.mxu0 %v80
    %v183 = vpop.f32.mrf.mxu0
    %v184 = vadd.f32 %v63, %v183
    %185 = vmatmul.f32.gmra.mxu0 %v83
    %v186 = vpop.f32.mrf.mxu0
    %v187 = vadd.f32 %v68, %v186
    %188 = vmatmul.f32.gmra.mxu0 %v86
    %v189 = vpop.f32.mrf.mxu0
    %v190 = vadd.f32 %v73, %v189
    %191 = vdwg.mxu0
    %192 = vmatpush.xpose.msra.mxu0 0.0
    %193 = vmatpush.xpose.msra.mxu0 0.0
    %194 = vmatpush.xpose.msra.mxu0 0.0
    %195 = vmatpush.xpose.msra.mxu0 0.0
    %196 = vmatpush.xpose.msra.mxu0 0.0
    %197 = vmatpush.xpose.msra.mxu0 0.0
    %198 = vmatpush.xpose.msra.mxu0 0.0
    %199 = vmatpush.xpose.msra.mxu0 %v161
    %200 = vmatpush.xpose.msra.mxu0 %v158
    %201 = vmatpush.xpose.msra.mxu0 %v155
    %202 = vmatpush.xpose.msra.mxu0 %v152
    %203 = vmatpush.xpose.msra.mxu0 %v149
    %204 = vmatpush.xpose.msra.mxu0 %v146
    %205 = vmatpush.xpose.msra.mxu0 %v143
    %206 = vmatpush.xpose.msra.mxu0 %v140
    %207 = vmatpush.xpose.msra.mxu0 %v137
    %208 = vmatmul.f32.gmra.mxu0 %v77
    %v209 = vpop.f32.mrf.mxu0
    %v210 = vadd.f32 %v58, %v209
    %211 = vmatmul.f32.gmra.mxu0 %v80
    %v212 = vpop.f32.mrf.mxu0
    %v213 = vadd.f32 %v63, %v212
    %214 = vmatmul.f32.gmra.mxu0 %v83
    %v215 = vpop.f32.mrf.mxu0
    %v216 = vadd.f32 %v68, %v215
    %217 = vmatmul.f32.gmra.mxu0 %v86
    %v218 = vpop.f32.mrf.mxu0
    %v219 = vadd.f32 %v73, %v218
    %220 = vdwg.mxu0
    %v221 = vmul.f32 %v181, %v181
    %v222 = vmul.f32 %v210, %v210
    %v223 = vmul.f32 %v184, %v184
    %v224 = vmul.f32 %v213, %v213
    %v225 = vmul.f32 %v187, %v187
    %v226 = vmul.f32 %v216, %v216
    %v227 = vmul.f32 %v190, %v190
    %v228 = vmul.f32 %v219, %v219
    %v229 = vadd.f32 %v221, %v223
    %v230 = vadd.f32 %v229, %v225
    %v231 = vadd.f32 %v230, %v227
    %v232 = vrot.slane %v231, 4
    %v233 = vadd.f32 %v231, %v232
    %v234 = vrot.slane %v233, 2
    %v235 = vadd.f32 %v233, %v234
    %v236 = vrot.slane %v235, 1
    %v237 = vadd.f32 %v235, %v236
    %vm238 = vcmask 588800
    %v239 = vsel %vm238, %v222, 0.0
    %v240 = vsel %vm238, %v224, 0.0
    %v241 = vadd.f32 %v239, %v240
    %v242 = vsel %vm238, %v226, 0.0
    %v243 = vadd.f32 %v241, %v242
    %v244 = vsel %vm238, %v228, 0.0
    %v245 = vadd.f32 %v243, %v244
    %v246 = vrot.slane %v245, 4
    %v247 = vadd.f32 %v245, %v246
    %v248 = vrot.slane %v247, 2
    %v249 = vadd.f32 %v247, %v248
    %v250 = vrot.slane %v249, 1
    %v251 = vadd.f32 %v249, %v250
    %vm252 = vcmp.ge.f32.partialorder %v237, 0.0
    %vm253 = vcmp.ge.f32.partialorder %v251, 0.0
    %v254 = vmul.f32 %v237, 0.01
    %v255 = vmul.f32 %v251, 0.01
    %v256 = vsel %vm252, %v237, %v254
    %v257 = vsel %vm253, %v251, %v255
    %v260 = vrot.slane %v257, 7
    %vm261 = vcmask 1040384
    %v262 = vsel %vm261, %v256, %v260
    %s264 = smul.u32 0, 2
    %s265 = scalar_lea.vmem [#allocation2], %s264
    %v266 = vlaneseq
    %vm267 = vcmp.ge.s32.totalorder %v266, 0
    %vm268 = vcmp.lt.s32.totalorder %v266, 200
    %vm269 = vmand %vm267, %vm268
    %270 = vst.msk [vmem:[%s265] sm:$0x3] %vm269, %v262
    %v271 = vld [vmem:[#allocation3] sm:$0x1]
    %v272 = vsel %vm238, %v257, -inf
    %v273 = vmax.f32 %v256, %v272
    %274 = vmax.xlane.f32.xlu0 %v273
    %v275 = vpop.xlane.xlu0 %274
    %v276 = vmax.f32 %v271, %v275
    %v277 = vld [vmem:[#allocation4] sm:$0x1]
    %v278 = vsub.f32 %v271, %v276
    %v279 = vmul.f32 %v278, 1.442695
    %v280 = vpow.pop %v279
    %v281 = vmul.f32 %v277, %v280
    %283 = vset.pattern.permute.xlu0 0
    %284 = vperm.xlu0 %283, %v276
    %v285 = vpop.permute.xlu0 %284
    %v287 = vperm.slane %v285, 0
    %v288 = vsub.f32 %v256, %v287
    %v289 = vsub.f32 %v257, %v287
    %v290 = vmul.f32 %v288, 1.442695
    %v291 = vpow.pop %v290
    %v292 = vmul.f32 %v289, 1.442695
    %v293 = vpow.pop %v292
    %v294 = vsel %vm238, %v293, 0.0
    %v295 = vadd.f32 %v291, %v294
    %296 = vadd.xlane.f32.xlu0 %v295
    %v297 = vpop.xlane.xlu0 %296
    %v298 = vadd.f32 %v281, %v297
    %vm299 = vcmask 0
    %300 = vst.msk [vmem:[#allocation4] sm:$0x1] %vm299, %v298
    %301 = vst.msk [vmem:[#allocation3] sm:$0x1] %vm299, %v276
    // Predicated region
    $region18: #{tpu_custom_call.1} parent=1 // pred_check
      %p302 = pneg %p15
    $region19: #{tpu_custom_call.1} parent=1 // pred_check_branch
      %304 = sbr.rel (%p302) target = $region21
    $region20: #{tpu_custom_call.1} parent=1 // pred_region
      %v305 = vld [vmem:[#allocation3] sm:$0x1]
      %v306 = vld [vmem:[#allocation4] sm:$0x1]
      %v307 = vlog2.pop %v306
      %v308 = vmul.f32 %v307, 0.6931472
      %v309 = vadd.f32 %v305, %v308
      %v310 = vld [vmem:[#allocation2] sm:$0x3]
      %312 = vset.pattern.permute.xlu0 0
      %313 = vperm.xlu0 %312, %v309
      %v314 = vpop.permute.xlu0 %313
      %v316 = vperm.slane %v314, 0
      %v317 = vsub.f32 %v310, %v316
      %v318 = vmul.f32 %v317, 1.442695
      %v319 = vpow.pop %v318
      %320 = vst.msk [vmem:[#allocation5] sm:$0x3] %vm269, %v319
    $region21: #{tpu_custom_call.1} parent=1 // pred_fallthru
      _
    // Predicated region
    $region22: #{tpu_custom_call.1} parent=1 // pred_check
      _
    $region23: #{tpu_custom_call.1} parent=1 // pred_check_branch
      %322 = sbr.rel (0) target = $region25
    $region24: #{tpu_custom_call.1} parent=1 // pred_region
      %324 = vsyncadd [#allocation6], 0
      %s326 = sshll.u32 [#allocation5], 4
      %s327 = int_to_ptr.vmem [resolvable:$true] %s326
      %s328 = sshll.u32 %s3, 4
      %s329 = int_to_ptr.hbm [resolvable:$true] %s328
      %331 = dma.vmem_to_hbm [thread:$0]  %s327, 32, %s329, [#allocation6]
    $region25: #{tpu_custom_call.1} parent=1 // pred_fallthru
      _
    // Predicated region
    $region26: #{tpu_custom_call.1} parent=1 // pred_check
      _
    $region27: #{tpu_custom_call.1} parent=1 // pred_check_branch
      %333 = sbr.rel (0) target = $region29
    $region28: #{tpu_custom_call.1} parent=1 // pred_region
      %335 = dma.done [#allocation6], 32
    $region29: #{tpu_custom_call.1} parent=1 // pred_fallthru
      _
    %336 = vsyncpa [#allocation6], 1

</llo_original>
